<compile_context>
chip_gen: v7x
topology: tpu7x:2x2x1
jax: 0.10.0
libtpu: 0.0.40
codegen_flags: <defaults>
</compile_context>

<pallas_src>
import math

import jax
import jax.numpy as jnp
from jax.experimental import pallas as pl
from jax.experimental.pallas import tpu as pltpu

HIDDEN = 256
LANE = 128
SUBLANE = 8


def _round_up(n, m):
    return ((n + m - 1) // m) * m


def _dqn_mlp_kernel(x_ref, w1_ref, b1_ref, w2_ref, b2_ref,
                    w3_ref, b3_ref, w4_ref, b4_ref, out_ref):
    """Fused forward for one batch tile.

    Matmuls run with bf16 operands on the MXU and f32 accumulation
    (preferred_element_type); bias-add / ReLU are done in f32 on the VPU.
    """
    x = x_ref[...]                                   # bf16 (tile_b, K_pad)

    h = jnp.dot(x, w1_ref[...],
                preferred_element_type=jnp.float32) + b1_ref[...]
    h = jnp.maximum(h, 0.0)

    h = jnp.dot(h.astype(jnp.bfloat16), w2_ref[...],
                preferred_element_type=jnp.float32) + b2_ref[...]
    h = jnp.maximum(h, 0.0)

    h = jnp.dot(h.astype(jnp.bfloat16), w3_ref[...],
                preferred_element_type=jnp.float32) + b3_ref[...]
    h = jnp.maximum(h, 0.0)

    y = jnp.dot(h.astype(jnp.bfloat16), w4_ref[...],
                preferred_element_type=jnp.float32) + b4_ref[...]
    out_ref[...] = y.astype(out_ref.dtype)           # lane-dense f32 store


def dqn_forward(x, params):
    """Run the fused, batch-tiled DQN MLP Pallas kernel.

    x: (B, input_size) float32
    params: dict with w1..w4 (in, out) and b1..b4 (1, out) float32 arrays.
    Returns (B, output_size) float32 Q-values.
    """
    w1, b1 = params["w1"], params["b1"]
    w2, b2 = params["w2"], params["b2"]
    w3, b3 = params["w3"], params["b3"]
    w4, b4 = params["w4"], params["b4"]

    B, in_size = x.shape
    out_size = w4.shape[1]

    # Alignment padding (all padding is zero, so results are unchanged).
    k_pad = _round_up(in_size, LANE)                  # layer-1 K -> 128-aligned
    n_pad = _round_up(out_size, LANE)                 # output N  -> lane-dense
    tile_b = min(128, _round_up(B, SUBLANE))          # batch tile (sublane-aligned)
    b_pad = _round_up(B, tile_b)

    f32, bf16 = jnp.float32, jnp.bfloat16
    x_p = jnp.zeros((b_pad, k_pad), bf16).at[:B, :in_size].set(x.astype(bf16))
    w1_p = jnp.zeros((k_pad, HIDDEN), bf16).at[:in_size, :].set(w1.astype(bf16))
    w2_c = w2.astype(bf16)
    w3_c = w3.astype(bf16)
    w4_p = jnp.zeros((HIDDEN, n_pad), bf16).at[:, :out_size].set(w4.astype(bf16))
    b4_p = jnp.zeros((1, n_pad), f32).at[:, :out_size].set(b4)

    grid = (b_pad // tile_b,)
    vmem = pltpu.MemorySpace.VMEM

    def resident(shape):
        # Weight / bias blocks: same block for every batch tile -> stay in VMEM.
        return pl.BlockSpec(shape, lambda i: (0, 0), memory_space=vmem)

    in_specs = [
        pl.BlockSpec((tile_b, k_pad), lambda i: (i, 0), memory_space=vmem),  # x
        resident((k_pad, HIDDEN)), resident((1, HIDDEN)),                    # w1, b1
        resident((HIDDEN, HIDDEN)), resident((1, HIDDEN)),                   # w2, b2
        resident((HIDDEN, HIDDEN)), resident((1, HIDDEN)),                   # w3, b3
        resident((HIDDEN, n_pad)), resident((1, n_pad)),                     # w4, b4
    ]
    out_spec = pl.BlockSpec((tile_b, n_pad), lambda i: (i, 0), memory_space=vmem)

    out_padded = pl.pallas_call(
        _dqn_mlp_kernel,
        out_shape=jax.ShapeDtypeStruct((b_pad, n_pad), jnp.float32),
        grid=grid,
        in_specs=in_specs,
        out_specs=out_spec,
        compiler_params=pltpu.CompilerParams(
            dimension_semantics=("parallel",)),  # v7x: shard batch over both TCs
    )(x_p, w1_p, b1, w2_c, b2, w3_c, b3, w4_p, b4_p)

    return out_padded[:B, :out_size]


def init_dqn_params(key, input_size, output_size, hidden=HIDDEN):
    """Deterministic init mimicking PyTorch nn.Linear defaults
    (uniform in [-1/sqrt(fan_in), 1/sqrt(fan_in)])."""
    dims = [(input_size, hidden), (hidden, hidden), (hidden, hidden),
            (hidden, output_size)]
    params = {}
    keys = jax.random.split(key, 2 * len(dims))
    for i, (fan_in, fan_out) in enumerate(dims):
        bound = 1.0 / math.sqrt(fan_in)
        w = jax.random.uniform(keys[2 * i], (fan_in, fan_out),
                               minval=-bound, maxval=bound, dtype=jnp.float32)
        b = jax.random.uniform(keys[2 * i + 1], (1, fan_out),
                               minval=-bound, maxval=bound, dtype=jnp.float32)
        params[f"w{i + 1}"] = w
        params[f"b{i + 1}"] = b
    return params


def dqn_forward_ref(x, params):
    """Pure-JAX reference mirroring the kernel's bf16-operand / f32-accumulate
    matmul precision."""
    def dot_bf16(a, w):
        return jnp.dot(a.astype(jnp.bfloat16), w.astype(jnp.bfloat16),
                       preferred_element_type=jnp.float32)

    h = jnp.maximum(dot_bf16(x, params["w1"]) + params["b1"], 0.0)
    h = jnp.maximum(dot_bf16(h, params["w2"]) + params["b2"], 0.0)
    h = jnp.maximum(dot_bf16(h, params["w3"]) + params["b3"], 0.0)
    return dot_bf16(h, params["w4"]) + params["b4"]


if __name__ == "__main__":
    key = jax.random.PRNGKey(0)
    k_param, k_x = jax.random.split(key)

    batch = 8
    input_size = 32
    output_size = 8

    params = init_dqn_params(k_param, input_size, output_size)
    x = jax.random.normal(k_x, (batch, input_size), dtype=jnp.float32)

    out = dqn_forward(x, params)
    out = jax.block_until_ready(out)

    ref = dqn_forward_ref(x, params)
    assert out.shape == (batch, output_size)
    assert jnp.allclose(out, ref, atol=1e-3, rtol=1e-3), "mismatch vs reference"

    print("KERNEL_OK")
</pallas_src>

<mosaic_0001>
module attributes {stable_mosaic.version = 11 : i64} {
  func.func @_dqn_mlp_kernel(%arg0: i32, %arg1: memref<8x128xbf16, #tpu.memory_space<vmem>>, %arg2: memref<128x256xbf16, #tpu.memory_space<vmem>>, %arg3: memref<1x256xf32, #tpu.memory_space<vmem>>, %arg4: memref<256x256xbf16, #tpu.memory_space<vmem>>, %arg5: memref<1x256xf32, #tpu.memory_space<vmem>>, %arg6: memref<256x256xbf16, #tpu.memory_space<vmem>>, %arg7: memref<1x256xf32, #tpu.memory_space<vmem>>, %arg8: memref<256x128xbf16, #tpu.memory_space<vmem>>, %arg9: memref<1x128xf32, #tpu.memory_space<vmem>>, %arg10: memref<8x128xf32, #tpu.memory_space<vmem>>) attributes {dimension_semantics = [#tpu.dimension_semantics<parallel>], iteration_bounds = array<i64: 1>, scalar_prefetch = 0 : i64, scratch_operands = 0 : i64, tpu.core_type = #tpu.core_type<tc>, window_params = [{transform_indices = @transform_0, window_bounds = array<i64: 8, 128>}, {pipeline_mode = #tpu.pipeline_mode<synchronous>, transform_indices = @transform_1, window_bounds = array<i64: 128, 256>}, {pipeline_mode = #tpu.pipeline_mode<synchronous>, transform_indices = @transform_2, window_bounds = array<i64: 1, 256>}, {pipeline_mode = #tpu.pipeline_mode<synchronous>, transform_indices = @transform_3, window_bounds = array<i64: 256, 256>}, {pipeline_mode = #tpu.pipeline_mode<synchronous>, transform_indices = @transform_4, window_bounds = array<i64: 1, 256>}, {pipeline_mode = #tpu.pipeline_mode<synchronous>, transform_indices = @transform_5, window_bounds = array<i64: 256, 256>}, {pipeline_mode = #tpu.pipeline_mode<synchronous>, transform_indices = @transform_6, window_bounds = array<i64: 1, 256>}, {pipeline_mode = #tpu.pipeline_mode<synchronous>, transform_indices = @transform_7, window_bounds = array<i64: 256, 128>}, {pipeline_mode = #tpu.pipeline_mode<synchronous>, transform_indices = @transform_8, window_bounds = array<i64: 1, 128>}, {transform_indices = @transform_9, window_bounds = array<i64: 8, 128>}]} {
    %c0 = arith.constant 0 : index
    %c0_0 = arith.constant 0 : index
    %0 = vector.load %arg1[%c0, %c0_0] : memref<8x128xbf16, #tpu.memory_space<vmem>>, vector<8x128xbf16>
    %c0_1 = arith.constant 0 : index
    %c0_2 = arith.constant 0 : index
    %1 = vector.load %arg2[%c0_1, %c0_2] : memref<128x256xbf16, #tpu.memory_space<vmem>>, vector<128x256xbf16>
    %cst = arith.constant dense<0.000000e+00> : vector<8x256xf32>
    %2 = tpu.matmul %0, %1, %cst {dimension_numbers = #tpu.dot_dimension_numbers<[1], [0], [0], [1], [0, 0, 1, 1], [], []>} : vector<8x128xbf16>, vector<128x256xbf16>, vector<8x256xf32> -> vector<8x256xf32>
    %c0_3 = arith.constant 0 : index
    %c0_4 = arith.constant 0 : index
    %3 = vector.load %arg3[%c0_3, %c0_4] : memref<1x256xf32, #tpu.memory_space<vmem>>, vector<1x256xf32>
    %4 = vector.broadcast %3 : vector<1x256xf32> to vector<8x256xf32>
    %5 = arith.addf %2, %4 : vector<8x256xf32>
    %cst_5 = arith.constant 0.000000e+00 : f32
    %6 = vector.broadcast %cst_5 : f32 to vector<8x256xf32>
    %7 = arith.maximumf %5, %6 : vector<8x256xf32>
    %8 = arith.truncf %7 : vector<8x256xf32> to vector<8x256xbf16>
    %c0_6 = arith.constant 0 : index
    %c0_7 = arith.constant 0 : index
    %9 = vector.load %arg4[%c0_6, %c0_7] : memref<256x256xbf16, #tpu.memory_space<vmem>>, vector<256x256xbf16>
    %cst_8 = arith.constant dense<0.000000e+00> : vector<8x256xf32>
    %10 = tpu.matmul %8, %9, %cst_8 {dimension_numbers = #tpu.dot_dimension_numbers<[1], [0], [0], [1], [0, 0, 1, 1], [], []>} : vector<8x256xbf16>, vector<256x256xbf16>, vector<8x256xf32> -> vector<8x256xf32>
    %c0_9 = arith.constant 0 : index
    %c0_10 = arith.constant 0 : index
    %11 = vector.load %arg5[%c0_9, %c0_10] : memref<1x256xf32, #tpu.memory_space<vmem>>, vector<1x256xf32>
    %12 = vector.broadcast %11 : vector<1x256xf32> to vector<8x256xf32>
    %13 = arith.addf %10, %12 : vector<8x256xf32>
    %cst_11 = arith.constant 0.000000e+00 : f32
    %14 = vector.broadcast %cst_11 : f32 to vector<8x256xf32>
    %15 = arith.maximumf %13, %14 : vector<8x256xf32>
    %16 = arith.truncf %15 : vector<8x256xf32> to vector<8x256xbf16>
    %c0_12 = arith.constant 0 : index
    %c0_13 = arith.constant 0 : index
    %17 = vector.load %arg6[%c0_12, %c0_13] : memref<256x256xbf16, #tpu.memory_space<vmem>>, vector<256x256xbf16>
    %cst_14 = arith.constant dense<0.000000e+00> : vector<8x256xf32>
    %18 = tpu.matmul %16, %17, %cst_14 {dimension_numbers = #tpu.dot_dimension_numbers<[1], [0], [0], [1], [0, 0, 1, 1], [], []>} : vector<8x256xbf16>, vector<256x256xbf16>, vector<8x256xf32> -> vector<8x256xf32>
    %c0_15 = arith.constant 0 : index
    %c0_16 = arith.constant 0 : index
    %19 = vector.load %arg7[%c0_15, %c0_16] : memref<1x256xf32, #tpu.memory_space<vmem>>, vector<1x256xf32>
    %20 = vector.broadcast %19 : vector<1x256xf32> to vector<8x256xf32>
    %21 = arith.addf %18, %20 : vector<8x256xf32>
    %cst_17 = arith.constant 0.000000e+00 : f32
    %22 = vector.broadcast %cst_17 : f32 to vector<8x256xf32>
    %23 = arith.maximumf %21, %22 : vector<8x256xf32>
    %24 = arith.truncf %23 : vector<8x256xf32> to vector<8x256xbf16>
    %c0_18 = arith.constant 0 : index
    %c0_19 = arith.constant 0 : index
    %25 = vector.load %arg8[%c0_18, %c0_19] : memref<256x128xbf16, #tpu.memory_space<vmem>>, vector<256x128xbf16>
    %cst_20 = arith.constant dense<0.000000e+00> : vector<8x128xf32>
    %26 = tpu.matmul %24, %25, %cst_20 {dimension_numbers = #tpu.dot_dimension_numbers<[1], [0], [0], [1], [0, 0, 1, 1], [], []>} : vector<8x256xbf16>, vector<256x128xbf16>, vector<8x128xf32> -> vector<8x128xf32>
    %c0_21 = arith.constant 0 : index
    %c0_22 = arith.constant 0 : index
    %27 = vector.load %arg9[%c0_21, %c0_22] : memref<1x128xf32, #tpu.memory_space<vmem>>, vector<1x128xf32>
    %28 = vector.broadcast %27 : vector<1x128xf32> to vector<8x128xf32>
    %29 = arith.addf %26, %28 : vector<8x128xf32>
    %c0_23 = arith.constant 0 : index
    %c0_24 = arith.constant 0 : index
    %30 = vector.load %arg10[%c0_23, %c0_24] : memref<8x128xf32, #tpu.memory_space<vmem>>, vector<8x128xf32>
    tpu.vector_store %arg10[%c0_23, %c0_24], %29 {strides = array<i32>} : memref<8x128xf32, #tpu.memory_space<vmem>>, vector<8x128xf32>,
    return
  }
  func.func @transform_0(%arg0: i32) -> (i32, i32) {
    %c0_i32 = arith.constant 0 : i32
    %c0_i32_0 = arith.constant 0 : i32
    return %arg0, %c0_i32 : i32, i32
  }
  func.func @transform_1(%arg0: i32) -> (i32, i32) {
    %c0_i32 = arith.constant 0 : i32
    %c0_i32_0 = arith.constant 0 : i32
    %c0_i32_1 = arith.constant 0 : i32
    return %c0_i32, %c0_i32_0 : i32, i32
  }
  func.func @transform_2(%arg0: i32) -> (i32, i32) {
    %c0_i32 = arith.constant 0 : i32
    %c0_i32_0 = arith.constant 0 : i32
    %c0_i32_1 = arith.constant 0 : i32
    return %c0_i32, %c0_i32_0 : i32, i32
  }
  func.func @transform_3(%arg0: i32) -> (i32, i32) {
    %c0_i32 = arith.constant 0 : i32
    %c0_i32_0 = arith.constant 0 : i32
    %c0_i32_1 = arith.constant 0 : i32
    return %c0_i32, %c0_i32_0 : i32, i32
  }
  func.func @transform_4(%arg0: i32) -> (i32, i32) {
    %c0_i32 = arith.constant 0 : i32
    %c0_i32_0 = arith.constant 0 : i32
    %c0_i32_1 = arith.constant 0 : i32
    return %c0_i32, %c0_i32_0 : i32, i32
  }
  func.func @transform_5(%arg0: i32) -> (i32, i32) {
    %c0_i32 = arith.constant 0 : i32
    %c0_i32_0 = arith.constant 0 : i32
    %c0_i32_1 = arith.constant 0 : i32
    return %c0_i32, %c0_i32_0 : i32, i32
  }
  func.func @transform_6(%arg0: i32) -> (i32, i32) {
    %c0_i32 = arith.constant 0 : i32
    %c0_i32_0 = arith.constant 0 : i32
    %c0_i32_1 = arith.constant 0 : i32
    return %c0_i32, %c0_i32_0 : i32, i32
  }
  func.func @transform_7(%arg0: i32) -> (i32, i32) {
    %c0_i32 = arith.constant 0 : i32
    %c0_i32_0 = arith.constant 0 : i32
    %c0_i32_1 = arith.constant 0 : i32
    return %c0_i32, %c0_i32_0 : i32, i32
  }
  func.func @transform_8(%arg0: i32) -> (i32, i32) {
    %c0_i32 = arith.constant 0 : i32
    %c0_i32_0 = arith.constant 0 : i32
    %c0_i32_1 = arith.constant 0 : i32
    return %c0_i32, %c0_i32_0 : i32, i32
  }
  func.func @transform_9(%arg0: i32) -> (i32, i32) {
    %c0_i32 = arith.constant 0 : i32
    %c0_i32_0 = arith.constant 0 : i32
    return %arg0, %c0_i32 : i32, i32
  }
}

</mosaic_0001>

<llo_original>
// kernel: tpu_custom_call.1
$region0: #{tpu_custom_call.1}
  #allocation0 [shape = 'u32[]', space=smem, size = 0x4, offset = 0x4, fixed_abs, tag = 'smem constant byte address 0x4 - core index']
  #allocation1 [shape = 'u32[144,128]{1,0:T(1,128)}', space=vmem, size = 0x12000, scoped, tag = 'internal scratch']
  %s0 = inlined_call_operand.hbm [shape: bf16[8,128], index: 0, kind: input, shape index: {}]
  %s1 = inlined_call_operand.hbm [shape: bf16[128,256], index: 1, kind: input, shape index: {}]
  %s2 = inlined_call_operand.vmem [shape: f32[1,256], index: 2, kind: input, shape index: {}]
  %s3 = inlined_call_operand.hbm [shape: bf16[256,256], index: 3, kind: input, shape index: {}]
  %s4 = inlined_call_operand.vmem [shape: f32[1,256], index: 4, kind: input, shape index: {}]
  %s5 = inlined_call_operand.hbm [shape: bf16[256,256], index: 5, kind: input, shape index: {}]
  %s6 = inlined_call_operand.vmem [shape: f32[1,256], index: 6, kind: input, shape index: {}]
  %s7 = inlined_call_operand.hbm [shape: bf16[256,128], index: 7, kind: input, shape index: {}]
  %s8 = inlined_call_operand.vmem [shape: f32[1,128], index: 8, kind: input, shape index: {}]
  %s9 = inlined_call_operand.hbm [shape: f32[8,128], index: 9, kind: output, shape index: {}]
  %s10 = sld [smem:[#allocation0]]
  $region66: #{tpu_custom_call.1} parent=0
    _
  %s12 = ssub.s32 1, %s10
  %s13 = scalar_select 0, %s12, %s10
  $region1: #{tpu_custom_call.1} parent=0
    #allocation2 [shape = 'u8[2048]{0}', space=vmem, size = 0x800, scoped, tag = 'input window, operand 0, single buffered']
    #allocation3 [shape = 's32[1]{0}', space=sflag, size = 0x4, scoped, tag = 'scoped memory for tpu_custom_call.1']
    #allocation4 [shape = 's32[1]{0}', space=sflag, size = 0x4, scoped, tag = 'scoped memory for tpu_custom_call.1']
    #allocation5 [shape = 'u8[65536]{0}', space=vmem, size = 0x10000, scoped, tag = 'input window, operand 1, single buffered']
    #allocation6 [shape = 's32[1]{0}', space=sflag, size = 0x4, scoped, tag = 'scoped memory for tpu_custom_call.1']
    #allocation7 [shape = 'u8[131072]{0}', space=vmem, size = 0x20000, scoped, tag = 'input window, operand 3, single buffered']
    #allocation8 [shape = 'u8[131072]{0}', space=vmem, size = 0x20000, scoped, tag = 'input window, operand 5, single buffered']
    #allocation9 [shape = 's32[1]{0}', space=sflag, size = 0x4, scoped, tag = 'scoped memory for tpu_custom_call.1']
    #allocation10 [shape = 'u8[65536]{0}', space=vmem, size = 0x10000, scoped, tag = 'input window, operand 7, single buffered']
    #allocation11 [shape = 'u8[4096]{0}', space=vmem, size = 0x1000, scoped, tag = 'output window, operand 0, single buffered']
    %14 = vsyncpa [#allocation3], 0
    %15 = vsyncpa [#allocation6], 0
    %16 = vsyncpa [#allocation9], 0
    %17 = vsyncpa [#allocation4], 0
    // Predicated region
    $region2: #{tpu_custom_call.1} parent=1 // pred_check
      _
    $region3: #{tpu_custom_call.1} parent=1 // pred_check_branch
      %19 = sbr.rel (0) target = $region5
    $region4: #{tpu_custom_call.1} parent=1 // pred_region
      %s21 = ssub.s32 64, 64
      %22 = vsyncadd [#allocation3], %s21
      %s24 = sshll.u32 [#allocation2], 4
      %s25 = int_to_ptr.vmem [resolvable:$true] %s24
      %27 = dma.hbm_to_vmem [thread:$0]  %s0, 64, %s25, [#allocation3]
    $region5: #{tpu_custom_call.1} parent=1 // pred_fallthru
      _
    // Predicated region
    $region6: #{tpu_custom_call.1} parent=1 // pred_check
      _
    $region7: #{tpu_custom_call.1} parent=1 // pred_check_branch
      %29 = sbr.rel (0) target = $region9
    $region8: #{tpu_custom_call.1} parent=1 // pred_region
      %s31 = ssub.s32 2048, 2048
      %32 = vsyncadd [#allocation6], %s31
      %s33 = sshll.u32 [#allocation5], 4
      %s34 = int_to_ptr.vmem [resolvable:$true] %s33
      %39 = dma.hbm_to_vmem [thread:$0]  %s1, 2048, %s34, [#allocation6], 128, 128, 8
    $region9: #{tpu_custom_call.1} parent=1 // pred_fallthru
      _
    // Predicated region
    $region10: #{tpu_custom_call.1} parent=1 // pred_check
      _
    $region11: #{tpu_custom_call.1} parent=1 // pred_check_branch
      %41 = sbr.rel (0) target = $region13
    $region12: #{tpu_custom_call.1} parent=1 // pred_region
      _
    $region13: #{tpu_custom_call.1} parent=1 // pred_fallthru
      _
    // Predicated region
    $region14: #{tpu_custom_call.1} parent=1 // pred_check
      _
    $region15: #{tpu_custom_call.1} parent=1 // pred_check_branch
      %43 = sbr.rel (0) target = $region17
    $region16: #{tpu_custom_call.1} parent=1 // pred_region
      %s45 = ssub.s32 4096, 4096
      %46 = vsyncadd [#allocation6], %s45
      %s47 = sshll.u32 [#allocation7], 4
      %s48 = int_to_ptr.vmem [resolvable:$true] %s47
      %53 = dma.hbm_to_vmem [thread:$0]  %s3, 4096, %s48, [#allocation6], 128, 128, 8
    $region17: #{tpu_custom_call.1} parent=1 // pred_fallthru
      _
    // Predicated region
    $region18: #{tpu_custom_call.1} parent=1 // pred_check
      _
    $region19: #{tpu_custom_call.1} parent=1 // pred_check_branch
      %55 = sbr.rel (0) target = $region21
    $region20: #{tpu_custom_call.1} parent=1 // pred_region
      _
    $region21: #{tpu_custom_call.1} parent=1 // pred_fallthru
      _
    // Predicated region
    $region22: #{tpu_custom_call.1} parent=1 // pred_check
      _
    $region23: #{tpu_custom_call.1} parent=1 // pred_check_branch
      %57 = sbr.rel (0) target = $region25
    $region24: #{tpu_custom_call.1} parent=1 // pred_region
      %s59 = ssub.s32 4096, 4096
      %60 = vsyncadd [#allocation9], %s59
      %s61 = sshll.u32 [#allocation8], 4
      %s62 = int_to_ptr.vmem [resolvable:$true] %s61
      %67 = dma.hbm_to_vmem [thread:$0]  %s5, 4096, %s62, [#allocation9], 128, 128, 8
    $region25: #{tpu_custom_call.1} parent=1 // pred_fallthru
      _
    // Predicated region
    $region26: #{tpu_custom_call.1} parent=1 // pred_check
      _
    $region27: #{tpu_custom_call.1} parent=1 // pred_check_branch
      %69 = sbr.rel (0) target = $region29
    $region28: #{tpu_custom_call.1} parent=1 // pred_region
      _
    $region29: #{tpu_custom_call.1} parent=1 // pred_fallthru
      _
    // Predicated region
    $region30: #{tpu_custom_call.1} parent=1 // pred_check
      _
    $region31: #{tpu_custom_call.1} parent=1 // pred_check_branch
      %71 = sbr.rel (0) target = $region33
    $region32: #{tpu_custom_call.1} parent=1 // pred_region
      %s73 = ssub.s32 2048, 2048
      %74 = vsyncadd [#allocation9], %s73
      %s75 = sshll.u32 [#allocation10], 4
      %s76 = int_to_ptr.vmem [resolvable:$true] %s75
      %81 = dma.hbm_to_vmem [thread:$0]  %s7, 2048, %s76, [#allocation9], 64, 64, 4
    $region33: #{tpu_custom_call.1} parent=1 // pred_fallthru
      _
    // Predicated region
    $region34: #{tpu_custom_call.1} parent=1 // pred_check
      _
    $region35: #{tpu_custom_call.1} parent=1 // pred_check_branch
      %83 = sbr.rel (0) target = $region37
    $region36: #{tpu_custom_call.1} parent=1 // pred_region
      _
    $region37: #{tpu_custom_call.1} parent=1 // pred_fallthru
      _
    // Predicated region
    $region38: #{tpu_custom_call.1} parent=1 // pred_check
      _
    $region39: #{tpu_custom_call.1} parent=1 // pred_check_branch
      %85 = sbr.rel (0) target = $region41
    $region40: #{tpu_custom_call.1} parent=1 // pred_region
      %86 = dma.done [#allocation3], 64
    $region41: #{tpu_custom_call.1} parent=1 // pred_fallthru
      _
    // Predicated region
    $region42: #{tpu_custom_call.1} parent=1 // pred_check
      _
    $region43: #{tpu_custom_call.1} parent=1 // pred_check_branch
      %88 = sbr.rel (0) target = $region45
    $region44: #{tpu_custom_call.1} parent=1 // pred_region
      %89 = dma.done [#allocation6], 2048
    $region45: #{tpu_custom_call.1} parent=1 // pred_fallthru
      _
    // Predicated region
    $region46: #{tpu_custom_call.1} parent=1 // pred_check
      _
    $region47: #{tpu_custom_call.1} parent=1 // pred_check_branch
      %91 = sbr.rel (0) target = $region49
    $region48: #{tpu_custom_call.1} parent=1 // pred_region
      %92 = dma.done [#allocation6], 4096
    $region49: #{tpu_custom_call.1} parent=1 // pred_fallthru
      _
    // Predicated region
    $region50: #{tpu_custom_call.1} parent=1 // pred_check
      _
    $region51: #{tpu_custom_call.1} parent=1 // pred_check_branch
      %94 = sbr.rel (0) target = $region53
    $region52: #{tpu_custom_call.1} parent=1 // pred_region
      %95 = dma.done [#allocation9], 4096
    $region53: #{tpu_custom_call.1} parent=1 // pred_fallthru
      _
    // Predicated region
    $region54: #{tpu_custom_call.1} parent=1 // pred_check
      _
    $region55: #{tpu_custom_call.1} parent=1 // pred_check_branch
      %97 = sbr.rel (0) target = $region57
    $region56: #{tpu_custom_call.1} parent=1 // pred_region
      %98 = dma.done [#allocation9], 2048
    $region57: #{tpu_custom_call.1} parent=1 // pred_fallthru
      _
    %v100 = vld [vmem:[#allocation2] sm:$0xf]
    %v101 = vld [vmem:[#allocation5] sm:$0xff]
    %v102 = vld [vmem:[#allocation5 + $0x8] sm:$0xff]
    %v103 = vld [vmem:[#allocation5 + $0x10] sm:$0xff]
    %v104 = vld [vmem:[#allocation5 + $0x18] sm:$0xff]
    %v105 = vld [vmem:[#allocation5 + $0x20] sm:$0xff]
    %v106 = vld [vmem:[#allocation5 + $0x28] sm:$0xff]
    %v107 = vld [vmem:[#allocation5 + $0x30] sm:$0xff]
    %v108 = vld [vmem:[#allocation5 + $0x38] sm:$0xff]
    %v109 = vld [vmem:[#allocation5 + $0x40] sm:$0xff]
    %v110 = vld [vmem:[#allocation5 + $0x48] sm:$0xff]
    %v111 = vld [vmem:[#allocation5 + $0x50] sm:$0xff]
    %v112 = vld [vmem:[#allocation5 + $0x58] sm:$0xff]
    %v113 = vld [vmem:[#allocation5 + $0x60] sm:$0xff]
    %v114 = vld [vmem:[#allocation5 + $0x68] sm:$0xff]
    %v115 = vld [vmem:[#allocation5 + $0x70] sm:$0xff]
    %v116 = vld [vmem:[#allocation5 + $0x78] sm:$0xff]
    %v117 = vld [vmem:[%s2] sm:$0x3]
    %v119 = vlaneseq
    %v120 = vshrl.u32 %v119, 7
    %v121 = vsub.s32 0, %v120
    %v122 = vrot.slane %v117, %v121
    %v123 = vlaneseq
    %v124 = vshrl.u32 %v123, 7
    %v125 = vsub.s32 1, %v124
    %v126 = vrot.slane %v117, %v125
    %v145 = vunpack.c.l.b16 %v101
    %v146 = vunpack.c.h.b16 %v101
    %v147 = vunpack.c.l.b16 %v102
    %v148 = vunpack.c.h.b16 %v102
    %v149 = vunpack.c.l.b16 %v103
    %v150 = vunpack.c.h.b16 %v103
    %v151 = vunpack.c.l.b16 %v104
    %v152 = vunpack.c.h.b16 %v104
    %v153 = vunpack.c.l.b16 %v105
    %v154 = vunpack.c.h.b16 %v105
    %v155 = vunpack.c.l.b16 %v106
    %v156 = vunpack.c.h.b16 %v106
    %v157 = vunpack.c.l.b16 %v107
    %v158 = vunpack.c.h.b16 %v107
    %v159 = vunpack.c.l.b16 %v108
    %v160 = vunpack.c.h.b16 %v108
    %v161 = vunpack.c.l.b16 %v109
    %v162 = vunpack.c.h.b16 %v109
    %v163 = vunpack.c.l.b16 %v110
    %v164 = vunpack.c.h.b16 %v110
    %v165 = vunpack.c.l.b16 %v111
    %v166 = vunpack.c.h.b16 %v111
    %v167 = vunpack.c.l.b16 %v112
    %v168 = vunpack.c.h.b16 %v112
    %v169 = vunpack.c.l.b16 %v113
    %v170 = vunpack.c.h.b16 %v113
    %v171 = vunpack.c.l.b16 %v114
    %v172 = vunpack.c.h.b16 %v114
    %v173 = vunpack.c.l.b16 %v115
    %v174 = vunpack.c.h.b16 %v115
    %v175 = vunpack.c.l.b16 %v116
    %v176 = vunpack.c.h.b16 %v116
    %v177 = vpack.c.b16 %v147, %v145
    %v178 = vpack.c.b16 %v148, %v146
    %v179 = vpack.c.b16 %v151, %v149
    %v180 = vpack.c.b16 %v152, %v150
    %v181 = vpack.c.b16 %v155, %v153
    %v182 = vpack.c.b16 %v156, %v154
    %v183 = vpack.c.b16 %v159, %v157
    %v184 = vpack.c.b16 %v160, %v158
    %v185 = vpack.c.b16 %v163, %v161
    %v186 = vpack.c.b16 %v164, %v162
    %v187 = vpack.c.b16 %v167, %v165
    %v188 = vpack.c.b16 %v168, %v166
    %v189 = vpack.c.b16 %v171, %v169
    %v190 = vpack.c.b16 %v172, %v170
    %v191 = vpack.c.b16 %v175, %v173
    %v192 = vpack.c.b16 %v176, %v174
    %209 = vmatprep.subr.bf16.mxu0 %v178
    %210 = vmatpush1.bf16.msra.mxu0 %v177
    %211 = vmatprep.subr.bf16.mxu0 %v180
    %212 = vmatpush1.bf16.msra.mxu0 %v179
    %213 = vmatprep.subr.bf16.mxu0 %v182
    %214 = vmatpush1.bf16.msra.mxu0 %v181
    %215 = vmatprep.subr.bf16.mxu0 %v184
    %216 = vmatpush1.bf16.msra.mxu0 %v183
    %217 = vmatprep.subr.bf16.mxu0 %v186
    %218 = vmatpush1.bf16.msra.mxu0 %v185
    %219 = vmatprep.subr.bf16.mxu0 %v188
    %220 = vmatpush1.bf16.msra.mxu0 %v187
    %221 = vmatprep.subr.bf16.mxu0 %v190
    %222 = vmatpush1.bf16.msra.mxu0 %v189
    %223 = vmatprep.subr.bf16.mxu0 %v192
    %224 = vmatpush1.bf16.msra.mxu0 %v191
    %225 = vmatprep.subr.bf16.mxu0 0
    %226 = vmatpush1.bf16.msra.mxu0 0
    %227 = vmatprep.subr.bf16.mxu0 0
    %228 = vmatpush1.bf16.msra.mxu0 0
    %229 = vmatprep.subr.bf16.mxu0 0
    %230 = vmatpush1.bf16.msra.mxu0 0
    %231 = vmatprep.subr.bf16.mxu0 0
    %232 = vmatpush1.bf16.msra.mxu0 0
    %233 = vmatprep.subr.bf16.mxu0 0
    %234 = vmatpush1.bf16.msra.mxu0 0
    %235 = vmatprep.subr.bf16.mxu0 0
    %236 = vmatpush1.bf16.msra.mxu0 0
    %237 = vmatprep.subr.bf16.mxu0 0
    %238 = vmatpush1.bf16.msra.mxu0 0
    %239 = vmatprep.subr.bf16.mxu0 0
    %240 = vmatpush1.bf16.msra.mxu0 0
    %241 = vmatprep.mubr.bf16.mxu0 0
    %242 = vmatmul.mubr.bf16.gmra.mrb[0].mxu0 %v100
    %v243 = vpop.f32.mrb[0].mxu0
    %v244 = vadd.f32 %v122, %v243
    %v245 = vpop.f32.mrb[0].mxu0
    %v246 = vadd.f32 %v126, %v245
    %v247 = vpop.f32.mrb[0].mxu0
    %v248 = vpop.f32.mrb[0].mxu0
    %249 = vdwg.mxu0
    %v250 = vmax.f32 %v244, 0.0
    %v251 = vmax.f32 %v246, 0.0
    %v252 = vpack.c.bf16 %v250, %v250
    %v253 = vpack.c.bf16 %v251, %v251
    %v254 = vld [vmem:[#allocation7] sm:$0xff]
    %v255 = vld [vmem:[#allocation7 + $0x8] sm:$0xff]
    %v256 = vld [vmem:[#allocation7 + $0x10] sm:$0xff]
    %v257 = vld [vmem:[#allocation7 + $0x18] sm:$0xff]
    %v258 = vld [vmem:[#allocation7 + $0x20] sm:$0xff]
    %v259 = vld [vmem:[#allocation7 + $0x28] sm:$0xff]
    %v260 = vld [vmem:[#allocation7 + $0x30] sm:$0xff]
    %v261 = vld [vmem:[#allocation7 + $0x38] sm:$0xff]
    %v262 = vld [vmem:[#allocation7 + $0x40] sm:$0xff]
    %v263 = vld [vmem:[#allocation7 + $0x48] sm:$0xff]
    %v264 = vld [vmem:[#allocation7 + $0x50] sm:$0xff]
    %v265 = vld [vmem:[#allocation7 + $0x58] sm:$0xff]
    %v266 = vld [vmem:[#allocation7 + $0x60] sm:$0xff]
    %v267 = vld [vmem:[#allocation7 + $0x68] sm:$0xff]
    %v268 = vld [vmem:[#allocation7 + $0x70] sm:$0xff]
    %v269 = vld [vmem:[#allocation7 + $0x78] sm:$0xff]
    %v270 = vld [vmem:[#allocation7 + $0x80] sm:$0xff]
    %v271 = vld [vmem:[#allocation7 + $0x88] sm:$0xff]
    %v272 = vld [vmem:[#allocation7 + $0x90] sm:$0xff]
    %v273 = vld [vmem:[#allocation7 + $0x98] sm:$0xff]
    %v274 = vld [vmem:[#allocation7 + $0xa0] sm:$0xff]
    %v275 = vld [vmem:[#allocation7 + $0xa8] sm:$0xff]
    %v276 = vld [vmem:[#allocation7 + $0xb0] sm:$0xff]
    %v277 = vld [vmem:[#allocation7 + $0xb8] sm:$0xff]
    %v278 = vld [vmem:[#allocation7 + $0xc0] sm:$0xff]
    %v279 = vld [vmem:[#allocation7 + $0xc8] sm:$0xff]
    %v280 = vld [vmem:[#allocation7 + $0xd0] sm:$0xff]
    %v281 = vld [vmem:[#allocation7 + $0xd8] sm:$0xff]
    %v282 = vld [vmem:[#allocation7 + $0xe0] sm:$0xff]
    %v283 = vld [vmem:[#allocation7 + $0xe8] sm:$0xff]
    %v284 = vld [vmem:[#allocation7 + $0xf0] sm:$0xff]
    %v285 = vld [vmem:[#allocation7 + $0xf8] sm:$0xff]
    %v286 = vld [vmem:[%s4] sm:$0x3]
    %v288 = vlaneseq
    %v289 = vshrl.u32 %v288, 7
    %v290 = vsub.s32 0, %v289
    %v291 = vrot.slane %v286, %v290
    %v292 = vlaneseq
    %v293 = vshrl.u32 %v292, 7
    %v294 = vsub.s32 1, %v293
    %v295 = vrot.slane %v286, %v294
    %v330 = vunpack.c.l.b16 %v254
    %v331 = vunpack.c.h.b16 %v254
    %v332 = vunpack.c.l.b16 %v255
    %v333 = vunpack.c.h.b16 %v255
    %v334 = vunpack.c.l.b16 %v256
    %v335 = vunpack.c.h.b16 %v256
    %v336 = vunpack.c.l.b16 %v257
    %v337 = vunpack.c.h.b16 %v257
    %v338 = vunpack.c.l.b16 %v258
    %v339 = vunpack.c.h.b16 %v258
    %v340 = vunpack.c.l.b16 %v259
    %v341 = vunpack.c.h.b16 %v259
    %v342 = vunpack.c.l.b16 %v260
    %v343 = vunpack.c.h.b16 %v260
    %v344 = vunpack.c.l.b16 %v261
    %v345 = vunpack.c.h.b16 %v261
    %v346 = vunpack.c.l.b16 %v262
    %v347 = vunpack.c.h.b16 %v262
    %v348 = vunpack.c.l.b16 %v263
    %v349 = vunpack.c.h.b16 %v263
    %v350 = vunpack.c.l.b16 %v264
    %v351 = vunpack.c.h.b16 %v264
    %v352 = vunpack.c.l.b16 %v265
    %v353 = vunpack.c.h.b16 %v265
    %v354 = vunpack.c.l.b16 %v266
    %v355 = vunpack.c.h.b16 %v266
    %v356 = vunpack.c.l.b16 %v267
    %v357 = vunpack.c.h.b16 %v267
    %v358 = vunpack.c.l.b16 %v268
    %v359 = vunpack.c.h.b16 %v268
    %v360 = vunpack.c.l.b16 %v269
    %v361 = vunpack.c.h.b16 %v269
    %v362 = vunpack.c.l.b16 %v270
    %v363 = vunpack.c.h.b16 %v270
    %v364 = vunpack.c.l.b16 %v271
    %v365 = vunpack.c.h.b16 %v271
    %v366 = vunpack.c.l.b16 %v272
    %v367 = vunpack.c.h.b16 %v272
    %v368 = vunpack.c.l.b16 %v273
    %v369 = vunpack.c.h.b16 %v273
    %v370 = vunpack.c.l.b16 %v274
    %v371 = vunpack.c.h.b16 %v274
    %v372 = vunpack.c.l.b16 %v275
    %v373 = vunpack.c.h.b16 %v275
    %v374 = vunpack.c.l.b16 %v276
    %v375 = vunpack.c.h.b16 %v276
    %v376 = vunpack.c.l.b16 %v277
    %v377 = vunpack.c.h.b16 %v277
    %v378 = vunpack.c.l.b16 %v278
    %v379 = vunpack.c.h.b16 %v278
    %v380 = vunpack.c.l.b16 %v279
    %v381 = vunpack.c.h.b16 %v279
    %v382 = vunpack.c.l.b16 %v280
    %v383 = vunpack.c.h.b16 %v280
    %v384 = vunpack.c.l.b16 %v281
    %v385 = vunpack.c.h.b16 %v281
    %v386 = vunpack.c.l.b16 %v282
    %v387 = vunpack.c.h.b16 %v282
    %v388 = vunpack.c.l.b16 %v283
    %v389 = vunpack.c.h.b16 %v283
    %v390 = vunpack.c.l.b16 %v284
    %v391 = vunpack.c.h.b16 %v284
    %v392 = vunpack.c.l.b16 %v285
    %v393 = vunpack.c.h.b16 %v285
    %v394 = vpack.c.b16 %v332, %v330
    %v395 = vpack.c.b16 %v333, %v331
    %v396 = vpack.c.b16 %v336, %v334
    %v397 = vpack.c.b16 %v337, %v335
    %v398 = vpack.c.b16 %v340, %v338
    %v399 = vpack.c.b16 %v341, %v339
    %v400 = vpack.c.b16 %v344, %v342
    %v401 = vpack.c.b16 %v345, %v343
    %v402 = vpack.c.b16 %v348, %v346
    %v403 = vpack.c.b16 %v349, %v347
    %v404 = vpack.c.b16 %v352, %v350
    %v405 = vpack.c.b16 %v353, %v351
    %v406 = vpack.c.b16 %v356, %v354
    %v407 = vpack.c.b16 %v357, %v355
    %v408 = vpack.c.b16 %v360, %v358
    %v409 = vpack.c.b16 %v361, %v359
    %v410 = vpack.c.b16 %v364, %v362
    %v411 = vpack.c.b16 %v365, %v363
    %v412 = vpack.c.b16 %v368, %v366
    %v413 = vpack.c.b16 %v369, %v367
    %v414 = vpack.c.b16 %v372, %v370
    %v415 = vpack.c.b16 %v373, %v371
    %v416 = vpack.c.b16 %v376, %v374
    %v417 = vpack.c.b16 %v377, %v375
    %v418 = vpack.c.b16 %v380, %v378
    %v419 = vpack.c.b16 %v381, %v379
    %v420 = vpack.c.b16 %v384, %v382
    %v421 = vpack.c.b16 %v385, %v383
    %v422 = vpack.c.b16 %v388, %v386
    %v423 = vpack.c.b16 %v389, %v387
    %v424 = vpack.c.b16 %v392, %v390
    %v425 = vpack.c.b16 %v393, %v391
    %458 = vmatprep.subr.bf16.mxu0 %v395
    %459 = vmatpush1.bf16.msra.mxu0 %v394
    %460 = vmatprep.subr.bf16.mxu0 %v397
    %461 = vmatpush1.bf16.msra.mxu0 %v396
    %462 = vmatprep.subr.bf16.mxu0 %v399
    %463 = vmatpush1.bf16.msra.mxu0 %v398
    %464 = vmatprep.subr.bf16.mxu0 %v401
    %465 = vmatpush1.bf16.msra.mxu0 %v400
    %466 = vmatprep.subr.bf16.mxu0 %v403
    %467 = vmatpush1.bf16.msra.mxu0 %v402
    %468 = vmatprep.subr.bf16.mxu0 %v405
    %469 = vmatpush1.bf16.msra.mxu0 %v404
    %470 = vmatprep.subr.bf16.mxu0 %v407
    %471 = vmatpush1.bf16.msra.mxu0 %v406
    %472 = vmatprep.subr.bf16.mxu0 %v409
    %473 = vmatpush1.bf16.msra.mxu0 %v408
    %474 = vmatprep.subr.bf16.mxu0 %v411
    %475 = vmatpush1.bf16.msra.mxu0 %v410
    %476 = vmatprep.subr.bf16.mxu0 %v413
    %477 = vmatpush1.bf16.msra.mxu0 %v412
    %478 = vmatprep.subr.bf16.mxu0 %v415
    %479 = vmatpush1.bf16.msra.mxu0 %v414
    %480 = vmatprep.subr.bf16.mxu0 %v417
    %481 = vmatpush1.bf16.msra.mxu0 %v416
    %482 = vmatprep.subr.bf16.mxu0 %v419
    %483 = vmatpush1.bf16.msra.mxu0 %v418
    %484 = vmatprep.subr.bf16.mxu0 %v421
    %485 = vmatpush1.bf16.msra.mxu0 %v420
    %486 = vmatprep.subr.bf16.mxu0 %v423
    %487 = vmatpush1.bf16.msra.mxu0 %v422
    %488 = vmatprep.subr.bf16.mxu0 %v425
    %489 = vmatpush1.bf16.msra.mxu0 %v424
    %490 = vmatprep.mubr.bf16.mxu0 %v253
    %491 = vmatmul.mubr.bf16.gmra.mrb[0].mxu0 %v252
    %v492 = vpop.f32.mrb[0].mxu0
    %v493 = vadd.f32 %v291, %v492
    %v494 = vpop.f32.mrb[0].mxu0
    %v495 = vadd.f32 %v295, %v494
    %v496 = vpop.f32.mrb[0].mxu0
    %v497 = vpop.f32.mrb[0].mxu0
    %498 = vdwg.mxu0
    %v499 = vmax.f32 %v493, 0.0
    %v500 = vmax.f32 %v495, 0.0
    %v501 = vpack.c.bf16 %v499, %v499
    %v502 = vpack.c.bf16 %v500, %v500
    %v503 = vld [vmem:[#allocation8] sm:$0xff]
    %v504 = vld [vmem:[#allocation8 + $0x8] sm:$0xff]
    %v505 = vld [vmem:[#allocation8 + $0x10] sm:$0xff]
    %v506 = vld [vmem:[#allocation8 + $0x18] sm:$0xff]
    %v507 = vld [vmem:[#allocation8 + $0x20] sm:$0xff]
    %v508 = vld [vmem:[#allocation8 + $0x28] sm:$0xff]
    %v509 = vld [vmem:[#allocation8 + $0x30] sm:$0xff]
    %v510 = vld [vmem:[#allocation8 + $0x38] sm:$0xff]
    %v511 = vld [vmem:[#allocation8 + $0x40] sm:$0xff]
    %v512 = vld [vmem:[#allocation8 + $0x48] sm:$0xff]
    %v513 = vld [vmem:[#allocation8 + $0x50] sm:$0xff]
    %v514 = vld [vmem:[#allocation8 + $0x58] sm:$0xff]
    %v515 = vld [vmem:[#allocation8 + $0x60] sm:$0xff]
    %v516 = vld [vmem:[#allocation8 + $0x68] sm:$0xff]
    %v517 = vld [vmem:[#allocation8 + $0x70] sm:$0xff]
    %v518 = vld [vmem:[#allocation8 + $0x78] sm:$0xff]
    %v519 = vld [vmem:[#allocation8 + $0x80] sm:$0xff]
    %v520 = vld [vmem:[#allocation8 + $0x88] sm:$0xff]
    %v521 = vld [vmem:[#allocation8 + $0x90] sm:$0xff]
    %v522 = vld [vmem:[#allocation8 + $0x98] sm:$0xff]
    %v523 = vld [vmem:[#allocation8 + $0xa0] sm:$0xff]
    %v524 = vld [vmem:[#allocation8 + $0xa8] sm:$0xff]
    %v525 = vld [vmem:[#allocation8 + $0xb0] sm:$0xff]
    %v526 = vld [vmem:[#allocation8 + $0xb8] sm:$0xff]
    %v527 = vld [vmem:[#allocation8 + $0xc0] sm:$0xff]
    %v528 = vld [vmem:[#allocation8 + $0xc8] sm:$0xff]
    %v529 = vld [vmem:[#allocation8 + $0xd0] sm:$0xff]
    %v530 = vld [vmem:[#allocation8 + $0xd8] sm:$0xff]
    %v531 = vld [vmem:[#allocation8 + $0xe0] sm:$0xff]
    %v532 = vld [vmem:[#allocation8 + $0xe8] sm:$0xff]
    %v533 = vld [vmem:[#allocation8 + $0xf0] sm:$0xff]
    %v534 = vld [vmem:[#allocation8 + $0xf8] sm:$0xff]
    %v535 = vld [vmem:[%s6] sm:$0x3]
    %v537 = vlaneseq
    %v538 = vshrl.u32 %v537, 7
    %v539 = vsub.s32 0, %v538
    %v540 = vrot.slane %v535, %v539
    %v541 = vlaneseq
    %v542 = vshrl.u32 %v541, 7
    %v543 = vsub.s32 1, %v542
    %v544 = vrot.slane %v535, %v543
    %v579 = vunpack.c.l.b16 %v503
    %v580 = vunpack.c.h.b16 %v503
    %v581 = vunpack.c.l.b16 %v504
    %v582 = vunpack.c.h.b16 %v504
    %v583 = vunpack.c.l.b16 %v505
    %v584 = vunpack.c.h.b16 %v505
    %v585 = vunpack.c.l.b16 %v506
    %v586 = vunpack.c.h.b16 %v506
    %v587 = vunpack.c.l.b16 %v507
    %v588 = vunpack.c.h.b16 %v507
    %v589 = vunpack.c.l.b16 %v508
    %v590 = vunpack.c.h.b16 %v508
    %v591 = vunpack.c.l.b16 %v509
    %v592 = vunpack.c.h.b16 %v509
    %v593 = vunpack.c.l.b16 %v510
    %v594 = vunpack.c.h.b16 %v510
    %v595 = vunpack.c.l.b16 %v511
    %v596 = vunpack.c.h.b16 %v511
    %v597 = vunpack.c.l.b16 %v512
    %v598 = vunpack.c.h.b16 %v512
    %v599 = vunpack.c.l.b16 %v513
    %v600 = vunpack.c.h.b16 %v513
    %v601 = vunpack.c.l.b16 %v514
    %v602 = vunpack.c.h.b16 %v514
    %v603 = vunpack.c.l.b16 %v515
    %v604 = vunpack.c.h.b16 %v515
    %v605 = vunpack.c.l.b16 %v516
    %v606 = vunpack.c.h.b16 %v516
    %v607 = vunpack.c.l.b16 %v517
    %v608 = vunpack.c.h.b16 %v517
    %v609 = vunpack.c.l.b16 %v518
    %v610 = vunpack.c.h.b16 %v518
    %v611 = vunpack.c.l.b16 %v519
    %v612 = vunpack.c.h.b16 %v519
    %v613 = vunpack.c.l.b16 %v520
    %v614 = vunpack.c.h.b16 %v520
    %v615 = vunpack.c.l.b16 %v521
    %v616 = vunpack.c.h.b16 %v521
    %v617 = vunpack.c.l.b16 %v522
    %v618 = vunpack.c.h.b16 %v522
    %v619 = vunpack.c.l.b16 %v523
    %v620 = vunpack.c.h.b16 %v523
    %v621 = vunpack.c.l.b16 %v524
    %v622 = vunpack.c.h.b16 %v524
    %v623 = vunpack.c.l.b16 %v525
    %v624 = vunpack.c.h.b16 %v525
    %v625 = vunpack.c.l.b16 %v526
    %v626 = vunpack.c.h.b16 %v526
    %v627 = vunpack.c.l.b16 %v527
    %v628 = vunpack.c.h.b16 %v527
    %v629 = vunpack.c.l.b16 %v528
    %v630 = vunpack.c.h.b16 %v528
    %v631 = vunpack.c.l.b16 %v529
    %v632 = vunpack.c.h.b16 %v529
    %v633 = vunpack.c.l.b16 %v530
    %v634 = vunpack.c.h.b16 %v530
    %v635 = vunpack.c.l.b16 %v531
    %v636 = vunpack.c.h.b16 %v531
    %v637 = vunpack.c.l.b16 %v532
    %v638 = vunpack.c.h.b16 %v532
    %v639 = vunpack.c.l.b16 %v533
    %v640 = vunpack.c.h.b16 %v533
    %v641 = vunpack.c.l.b16 %v534
    %v642 = vunpack.c.h.b16 %v534
    %v643 = vpack.c.b16 %v581, %v579
    %v644 = vpack.c.b16 %v582, %v580
    %v645 = vpack.c.b16 %v585, %v583
    %v646 = vpack.c.b16 %v586, %v584
    %v647 = vpack.c.b16 %v589, %v587
    %v648 = vpack.c.b16 %v590, %v588
    %v649 = vpack.c.b16 %v593, %v591
    %v650 = vpack.c.b16 %v594, %v592
    %v651 = vpack.c.b16 %v597, %v595
    %v652 = vpack.c.b16 %v598, %v596
    %v653 = vpack.c.b16 %v601, %v599
    %v654 = vpack.c.b16 %v602, %v600
    %v655 = vpack.c.b16 %v605, %v603
    %v656 = vpack.c.b16 %v606, %v604
    %v657 = vpack.c.b16 %v609, %v607
    %v658 = vpack.c.b16 %v610, %v608
    %v659 = vpack.c.b16 %v613, %v611
    %v660 = vpack.c.b16 %v614, %v612
    %v661 = vpack.c.b16 %v617, %v615
    %v662 = vpack.c.b16 %v618, %v616
    %v663 = vpack.c.b16 %v621, %v619
    %v664 = vpack.c.b16 %v622, %v620
    %v665 = vpack.c.b16 %v625, %v623
    %v666 = vpack.c.b16 %v626, %v624
    %v667 = vpack.c.b16 %v629, %v627
    %v668 = vpack.c.b16 %v630, %v628
    %v669 = vpack.c.b16 %v633, %v631
    %v670 = vpack.c.b16 %v634, %v632
    %v671 = vpack.c.b16 %v637, %v635
    %v672 = vpack.c.b16 %v638, %v636
    %v673 = vpack.c.b16 %v641, %v639
    %v674 = vpack.c.b16 %v642, %v640
    %707 = vmatprep.subr.bf16.mxu0 %v644
    %708 = vmatpush1.bf16.msra.mxu0 %v643
    %709 = vmatprep.subr.bf16.mxu0 %v646
    %710 = vmatpush1.bf16.msra.mxu0 %v645
    %711 = vmatprep.subr.bf16.mxu0 %v648
    %712 = vmatpush1.bf16.msra.mxu0 %v647
    %713 = vmatprep.subr.bf16.mxu0 %v650
    %714 = vmatpush1.bf16.msra.mxu0 %v649
    %715 = vmatprep.subr.bf16.mxu0 %v652
    %716 = vmatpush1.bf16.msra.mxu0 %v651
    %717 = vmatprep.subr.bf16.mxu0 %v654
    %718 = vmatpush1.bf16.msra.mxu0 %v653
    %719 = vmatprep.subr.bf16.mxu0 %v656
    %720 = vmatpush1.bf16.msra.mxu0 %v655
    %721 = vmatprep.subr.bf16.mxu0 %v658
    %722 = vmatpush1.bf16.msra.mxu0 %v657
    %723 = vmatprep.subr.bf16.mxu0 %v660
    %724 = vmatpush1.bf16.msra.mxu0 %v659
    %725 = vmatprep.subr.bf16.mxu0 %v662
    %726 = vmatpush1.bf16.msra.mxu0 %v661
    %727 = vmatprep.subr.bf16.mxu0 %v664
    %728 = vmatpush1.bf16.msra.mxu0 %v663
    %729 = vmatprep.subr.bf16.mxu0 %v666
    %730 = vmatpush1.bf16.msra.mxu0 %v665
    %731 = vmatprep.subr.bf16.mxu0 %v668
    %732 = vmatpush1.bf16.msra.mxu0 %v667
    %733 = vmatprep.subr.bf16.mxu0 %v670
    %734 = vmatpush1.bf16.msra.mxu0 %v669
    %735 = vmatprep.subr.bf16.mxu0 %v672
    %736 = vmatpush1.bf16.msra.mxu0 %v671
    %737 = vmatprep.subr.bf16.mxu0 %v674
    %738 = vmatpush1.bf16.msra.mxu0 %v673
    %739 = vmatprep.mubr.bf16.mxu0 %v502
    %740 = vmatmul.mubr.bf16.gmra.mrb[0].mxu0 %v501
    %v741 = vpop.f32.mrb[0].mxu0
    %v742 = vadd.f32 %v540, %v741
    %v743 = vpop.f32.mrb[0].mxu0
    %v744 = vadd.f32 %v544, %v743
    %v745 = vpop.f32.mrb[0].mxu0
    %v746 = vpop.f32.mrb[0].mxu0
    %747 = vdwg.mxu0
    %v748 = vmax.f32 %v742, 0.0
    %v749 = vmax.f32 %v744, 0.0
    %v750 = vpack.c.bf16 %v748, %v748
    %v751 = vpack.c.bf16 %v749, %v749
    %v752 = vld [vmem:[#allocation10] sm:$0xf]
    %v753 = vld [vmem:[#allocation10 + $0x4] sm:$0xf]
    %v754 = vld [vmem:[#allocation10 + $0x8] sm:$0xf]
    %v755 = vld [vmem:[#allocation10 + $0xc] sm:$0xf]
    %v756 = vld [vmem:[#allocation10 + $0x10] sm:$0xf]
    %v757 = vld [vmem:[#allocation10 + $0x14] sm:$0xf]
    %v758 = vld [vmem:[#allocation10 + $0x18] sm:$0xf]
    %v759 = vld [vmem:[#allocation10 + $0x1c] sm:$0xf]
    %v760 = vld [vmem:[#allocation10 + $0x20] sm:$0xf]
    %v761 = vld [vmem:[#allocation10 + $0x24] sm:$0xf]
    %v762 = vld [vmem:[#allocation10 + $0x28] sm:$0xf]
    %v763 = vld [vmem:[#allocation10 + $0x2c] sm:$0xf]
    %v764 = vld [vmem:[#allocation10 + $0x30] sm:$0xf]
    %v765 = vld [vmem:[#allocation10 + $0x34] sm:$0xf]
    %v766 = vld [vmem:[#allocation10 + $0x38] sm:$0xf]
    %v767 = vld [vmem:[#allocation10 + $0x3c] sm:$0xf]
    %v768 = vld [vmem:[#allocation10 + $0x40] sm:$0xf]
    %v769 = vld [vmem:[#allocation10 + $0x44] sm:$0xf]
    %v770 = vld [vmem:[#allocation10 + $0x48] sm:$0xf]
    %v771 = vld [vmem:[#allocation10 + $0x4c] sm:$0xf]
    %v772 = vld [vmem:[#allocation10 + $0x50] sm:$0xf]
    %v773 = vld [vmem:[#allocation10 + $0x54] sm:$0xf]
    %v774 = vld [vmem:[#allocation10 + $0x58] sm:$0xf]
    %v775 = vld [vmem:[#allocation10 + $0x5c] sm:$0xf]
    %v776 = vld [vmem:[#allocation10 + $0x60] sm:$0xf]
    %v777 = vld [vmem:[#allocation10 + $0x64] sm:$0xf]
    %v778 = vld [vmem:[#allocation10 + $0x68] sm:$0xf]
    %v779 = vld [vmem:[#allocation10 + $0x6c] sm:$0xf]
    %v780 = vld [vmem:[#allocation10 + $0x70] sm:$0xf]
    %v781 = vld [vmem:[#allocation10 + $0x74] sm:$0xf]
    %v782 = vld [vmem:[#allocation10 + $0x78] sm:$0xf]
    %v783 = vld [vmem:[#allocation10 + $0x7c] sm:$0xf]
    %v784 = vld [vmem:[%s8] sm:$0x1]
    %v786 = vlaneseq
    %v787 = vshrl.u32 %v786, 7
    %v788 = vsub.s32 0, %v787
    %v789 = vrot.slane %v784, %v788
    %v823 = vunpack.c.l.b16 %v752
    %v824 = vunpack.c.l.b16 %v753
    %v825 = vunpack.c.l.b16 %v754
    %v826 = vunpack.c.l.b16 %v755
    %v827 = vunpack.c.l.b16 %v756
    %v828 = vunpack.c.l.b16 %v757
    %v829 = vunpack.c.l.b16 %v758
    %v830 = vunpack.c.l.b16 %v759
    %v831 = vunpack.c.l.b16 %v760
    %v832 = vunpack.c.l.b16 %v761
    %v833 = vunpack.c.l.b16 %v762
    %v834 = vunpack.c.l.b16 %v763
    %v835 = vunpack.c.l.b16 %v764
    %v836 = vunpack.c.l.b16 %v765
    %v837 = vunpack.c.l.b16 %v766
    %v838 = vunpack.c.l.b16 %v767
    %v839 = vunpack.c.l.b16 %v768
    %v840 = vunpack.c.l.b16 %v769
    %v841 = vunpack.c.l.b16 %v770
    %v842 = vunpack.c.l.b16 %v771
    %v843 = vunpack.c.l.b16 %v772
    %v844 = vunpack.c.l.b16 %v773
    %v845 = vunpack.c.l.b16 %v774
    %v846 = vunpack.c.l.b16 %v775
    %v847 = vunpack.c.l.b16 %v776
    %v848 = vunpack.c.l.b16 %v777
    %v849 = vunpack.c.l.b16 %v778
    %v850 = vunpack.c.l.b16 %v779
    %v851 = vunpack.c.l.b16 %v780
    %v852 = vunpack.c.l.b16 %v781
    %v853 = vunpack.c.l.b16 %v782
    %v854 = vunpack.c.l.b16 %v783
    %v855 = vpack.c.b16 %v824, %v823
    %v856 = vpack.c.b16 %v826, %v825
    %v857 = vpack.c.b16 %v828, %v827
    %v858 = vpack.c.b16 %v830, %v829
    %v859 = vpack.c.b16 %v832, %v831
    %v860 = vpack.c.b16 %v834, %v833
    %v861 = vpack.c.b16 %v836, %v835
    %v862 = vpack.c.b16 %v838, %v837
    %v863 = vpack.c.b16 %v840, %v839
    %v864 = vpack.c.b16 %v842, %v841
    %v865 = vpack.c.b16 %v844, %v843
    %v866 = vpack.c.b16 %v846, %v845
    %v867 = vpack.c.b16 %v848, %v847
    %v868 = vpack.c.b16 %v850, %v849
    %v869 = vpack.c.b16 %v852, %v851
    %v870 = vpack.c.b16 %v854, %v853
    %887 = vmatprep.subr.bf16.mxu0 0
    %888 = vmatpush1.bf16.msra.mxu0 %v855
    %889 = vmatprep.subr.bf16.mxu0 0
    %890 = vmatpush1.bf16.msra.mxu0 %v856
    %891 = vmatprep.subr.bf16.mxu0 0
    %892 = vmatpush1.bf16.msra.mxu0 %v857
    %893 = vmatprep.subr.bf16.mxu0 0
    %894 = vmatpush1.bf16.msra.mxu0 %v858
    %895 = vmatprep.subr.bf16.mxu0 0
    %896 = vmatpush1.bf16.msra.mxu0 %v859
    %897 = vmatprep.subr.bf16.mxu0 0
    %898 = vmatpush1.bf16.msra.mxu0 %v860
    %899 = vmatprep.subr.bf16.mxu0 0
    %900 = vmatpush1.bf16.msra.mxu0 %v861
    %901 = vmatprep.subr.bf16.mxu0 0
    %902 = vmatpush1.bf16.msra.mxu0 %v862
    %903 = vmatprep.subr.bf16.mxu0 0
    %904 = vmatpush1.bf16.msra.mxu0 %v863
    %905 = vmatprep.subr.bf16.mxu0 0
    %906 = vmatpush1.bf16.msra.mxu0 %v864
    %907 = vmatprep.subr.bf16.mxu0 0
    %908 = vmatpush1.bf16.msra.mxu0 %v865
    %909 = vmatprep.subr.bf16.mxu0 0
    %910 = vmatpush1.bf16.msra.mxu0 %v866
    %911 = vmatprep.subr.bf16.mxu0 0
    %912 = vmatpush1.bf16.msra.mxu0 %v867
    %913 = vmatprep.subr.bf16.mxu0 0
    %914 = vmatpush1.bf16.msra.mxu0 %v868
    %915 = vmatprep.subr.bf16.mxu0 0
    %916 = vmatpush1.bf16.msra.mxu0 %v869
    %917 = vmatprep.subr.bf16.mxu0 0
    %918 = vmatpush1.bf16.msra.mxu0 %v870
    %919 = vmatprep.mubr.bf16.mxu0 %v751
    %920 = vmatmul.mubr.bf16.gmra.mrb[0].mxu0 %v750
    %v921 = vpop.f32.mrb[0].mxu0
    %v922 = vadd.f32 %v789, %v921
    %v923 = vpop.f32.mrb[0].mxu0
    %v924 = vpop.f32.mrb[0].mxu0
    %v925 = vpop.f32.mrb[0].mxu0
    %926 = vdwg.mxu0
    %927 = vst [vmem:[#allocation11] sm:$0xff] %v922
    // Predicated region
    $region58: #{tpu_custom_call.1} parent=1 // pred_check
      _
    $region59: #{tpu_custom_call.1} parent=1 // pred_check_branch
      %929 = sbr.rel (0) target = $region61
    $region60: #{tpu_custom_call.1} parent=1 // pred_region
      %s931 = ssub.s32 128, 128
      %932 = vsyncadd [#allocation4], %s931
      %s934 = sshll.u32 [#allocation11], 4
      %s935 = int_to_ptr.vmem [resolvable:$true] %s934
      %937 = dma.vmem_to_hbm [thread:$0]  %s935, 128, %s9, [#allocation4]
    $region61: #{tpu_custom_call.1} parent=1 // pred_fallthru
      _
    // Predicated region
    $region62: #{tpu_custom_call.1} parent=1 // pred_check
      _
    $region63: #{tpu_custom_call.1} parent=1 // pred_check_branch
      %939 = sbr.rel (0) target = $region65
    $region64: #{tpu_custom_call.1} parent=1 // pred_region
      %940 = dma.done [#allocation4], 128
    $region65: #{tpu_custom_call.1} parent=1 // pred_fallthru
      _
    %941 = vsyncpa [#allocation3], 1
    %942 = vsyncpa [#allocation6], 1
    %943 = vsyncpa [#allocation9], 1
    %944 = vsyncpa [#allocation4], 1

</llo_original>
